<compile_context>
chip_gen: v6e
topology: v6e:2x2x1
jax: 0.10.0
libtpu: 0.0.40
codegen_flags: <defaults>
</compile_context>

<pallas_src>
import functools

import jax
import jax.numpy as jnp
from jax.experimental import pallas as pl
from jax.experimental.pallas import tpu as pltpu


def _round_up(x, m):
    return ((x + m - 1) // m) * m


def _conv2d_kernel(w_ref, b_ref, x_ref, o_ref, *, kh, kw, tile_oh, ow_pad):
    """One output row-tile of a valid 2D cross-correlation + scalar bias.

    w_ref : SMEM (kh*kw,) f32                       flattened weights (scalar reads)
    b_ref : SMEM (1,)     f32                       bias
    x_ref : VMEM (tile_oh + kh - 1, ow_pad + kw - 1) f32  haloed input tile
    o_ref : VMEM (tile_oh, ow_pad) f32              output tile (lane-dense)
    """
    # Initialize the accumulator with the bias -> saves one full-tile VPU add.
    acc = jnp.full((tile_oh, ow_pad), b_ref[0], dtype=jnp.float32)
    # kh, kw are small & static: fully unroll the shift-MAC loop (pure VPU work).
    # Each shifted tap is read straight from the ref (static slice) instead of
    # slicing a materialized copy -> shorter live ranges / less vreg pressure.
    for i in range(kh):
        for j in range(kw):
            acc = acc + w_ref[i * kw + j] * x_ref[pl.ds(i, tile_oh), pl.ds(j, ow_pad)]
    o_ref[...] = acc


def conv2d_pallas(x, weight, bias, *, max_tile_rows=512):
    """corr2d(x, weight) + bias, matching the PyTorch Conv2D.forward."""
    x = x.astype(jnp.float32)
    weight = weight.astype(jnp.float32)
    bias = bias.astype(jnp.float32)

    H, W = x.shape
    kh, kw = weight.shape
    if kh > H or kw > W:
        raise ValueError("kernel larger than input image")
    oh, ow = H - kh + 1, W - kw + 1

    # ---- lane/sublane-dense padded output geometry --------------------------
    ow_pad = _round_up(ow, 128)            # lane-dense output -> unmasked vst
    # Row-tile size: multiple of 8, capped so the double-buffered working set
    # (haloed input tile + output tile) stays small on every generation
    # (v5e 16 MiB scoped default, v7x 64 MiB physical VMEM).
    budget_elems = 1 << 20                 # ~4 MiB of f32 per output tile
    cap = max(8, min(max_tile_rows, (budget_elems // ow_pad) // 8 * 8))
    tile_oh = min(cap, _round_up(oh, 8))
    oh_pad = _round_up(oh, tile_oh)
    num_tiles = oh_pad // tile_oh

    tile_ih = tile_oh + kh - 1             # halo rows per input tile
    w_pad = ow_pad + kw - 1
    h_pad = oh_pad + kh - 1

    # Zero-pad the image, then lay out one contiguous haloed slab per row-tile
    # so the Blocked input BlockSpecs never need to overlap.
    x_padded = jnp.pad(x, ((0, h_pad - H), (0, w_pad - W)))
    if num_tiles == 1:
        x_tiles = x_padded[None]
    else:
        x_tiles = jnp.stack(
            [x_padded[t * tile_oh:t * tile_oh + tile_ih] for t in range(num_tiles)]
        )

    kernel = functools.partial(
        _conv2d_kernel, kh=kh, kw=kw, tile_oh=tile_oh, ow_pad=ow_pad
    )

    # Scoped-VMEM budget: 2x (input tile + output tile) for double buffering
    # plus headroom; capped below v7x's 64 MiB physical VMEM.
    in_bytes = tile_ih * w_pad * 4
    out_bytes = tile_oh * ow_pad * 4
    vmem_limit = int(min(56 * 1024 * 1024,
                         max(16 * 1024 * 1024,
                             2 * (in_bytes + out_bytes) + (4 << 20))))

    out_padded = pl.pallas_call(
        kernel,
        out_shape=jax.ShapeDtypeStruct((oh_pad, ow_pad), jnp.float32),
        grid=(num_tiles,),
        in_specs=[
            pl.BlockSpec(memory_space=pltpu.SMEM),                       # weight (kh*kw,)
            pl.BlockSpec(memory_space=pltpu.SMEM),                       # bias   (1,)
            pl.BlockSpec((None, tile_ih, w_pad), lambda t: (t, 0, 0)),   # haloed x tiles
        ],
        out_specs=pl.BlockSpec((tile_oh, ow_pad), lambda t: (t, 0)),
        compiler_params=pltpu.CompilerParams(
            dimension_semantics=("parallel",),   # row tiles independent (2 TCs on v7x)
            vmem_limit_bytes=vmem_limit,
        ),
    )(weight.reshape(-1), bias, x_tiles)

    return out_padded[:oh, :ow]


def conv2d_ref(x, weight, bias):
    """Pure-JAX reference (same semantics as corr2d + bias)."""
    H, W = x.shape
    kh, kw = weight.shape
    oh, ow = H - kh + 1, W - kw + 1
    out = jnp.zeros((oh, ow), jnp.float32)
    for i in range(kh):
        for j in range(kw):
            out = out + weight[i, j] * x[i:i + oh, j:j + ow]
    return out + bias[0]


if __name__ == "__main__":
    key = jax.random.PRNGKey(0)
    k_x, k_w, k_b = jax.random.split(key, 3)

    # Shapes consistent with the module: a single 16x16 image, 3x3 kernel.
    H, W = 16, 16
    kernel_size = (3, 3)

    x = jax.random.normal(k_x, (H, W), dtype=jnp.float32)
    weight = jax.random.normal(k_w, kernel_size, dtype=jnp.float32)  # torch.randn(kernel_size)
    bias = jax.random.normal(k_b, (1,), dtype=jnp.float32)           # torch.randn(1)

    out = conv2d_pallas(x, weight, bias)
    out = jax.block_until_ready(out)

    ref = conv2d_ref(x, weight, bias)
    assert out.shape == (H - kernel_size[0] + 1, W - kernel_size[1] + 1)
    assert jnp.allclose(out, ref, atol=1e-5, rtol=1e-5)

    # Second small check that exercises the multi-tile (grid > 1) halo path.
    x2 = jax.random.normal(k_x, (40, 40), dtype=jnp.float32)
    out2 = jax.block_until_ready(conv2d_pallas(x2, weight, bias, max_tile_rows=8))
    ref2 = conv2d_ref(x2, weight, bias)
    assert out2.shape == (38, 38)
    assert jnp.allclose(out2, ref2, atol=1e-5, rtol=1e-5)

    print("KERNEL_OK")
</pallas_src>

<mosaic_0001>
module attributes {stable_mosaic.version = 11 : i64} {
  func.func @_conv2d_kernel(%arg0: i32, %arg1: memref<9xf32, #tpu.memory_space<smem>>, %arg2: memref<1xf32, #tpu.memory_space<smem>>, %arg3: memref<1x18x130xf32, #tpu.memory_space<vmem>>, %arg4: memref<16x128xf32, #tpu.memory_space<vmem>>) attributes {dimension_semantics = [#tpu.dimension_semantics<parallel>], iteration_bounds = array<i64: 1>, scalar_prefetch = 0 : i64, scratch_operands = 0 : i64, tpu.core_type = #tpu.core_type<tc>, window_params = [{transform_indices = @transform_0, window_bounds = array<i64: 9>}, {transform_indices = @transform_1, window_bounds = array<i64: 1>}, {transform_indices = @transform_2, window_bounds = array<i64: 1, 18, 130>}, {transform_indices = @transform_3, window_bounds = array<i64: 16, 128>}]} {
    %c0 = arith.constant 0 : index
    %0 = memref.load %arg2[%c0] : memref<1xf32, #tpu.memory_space<smem>>
    %1 = vector.broadcast %0 : f32 to vector<16x128xf32>
    %c0_0 = arith.constant 0 : index
    %2 = memref.load %arg1[%c0_0] : memref<9xf32, #tpu.memory_space<smem>>
    %c0_1 = arith.constant 0 : index
    %c0_2 = arith.constant 0 : index
    %c0_3 = arith.constant 0 : index
    %3 = vector.load %arg3[%c0_1, %c0_2, %c0_3] : memref<1x18x130xf32, #tpu.memory_space<vmem>>, vector<1x16x128xf32>
    %4 = vector.shape_cast %3 : vector<1x16x128xf32> to vector<16x128xf32>
    %5 = vector.broadcast %2 : f32 to vector<16x128xf32>
    %6 = arith.mulf %5, %4 : vector<16x128xf32>
    %7 = arith.addf %1, %6 : vector<16x128xf32>
    %c1 = arith.constant 1 : index
    %8 = memref.load %arg1[%c1] : memref<9xf32, #tpu.memory_space<smem>>
    %c0_4 = arith.constant 0 : index
    %c0_5 = arith.constant 0 : index
    %c1_6 = arith.constant 1 : index
    %9 = vector.load %arg3[%c0_4, %c0_5, %c1_6] : memref<1x18x130xf32, #tpu.memory_space<vmem>>, vector<1x16x128xf32>
    %10 = vector.shape_cast %9 : vector<1x16x128xf32> to vector<16x128xf32>
    %11 = vector.broadcast %8 : f32 to vector<16x128xf32>
    %12 = arith.mulf %11, %10 : vector<16x128xf32>
    %13 = arith.addf %7, %12 : vector<16x128xf32>
    %c2 = arith.constant 2 : index
    %14 = memref.load %arg1[%c2] : memref<9xf32, #tpu.memory_space<smem>>
    %c0_7 = arith.constant 0 : index
    %c0_8 = arith.constant 0 : index
    %c2_9 = arith.constant 2 : index
    %15 = vector.load %arg3[%c0_7, %c0_8, %c2_9] : memref<1x18x130xf32, #tpu.memory_space<vmem>>, vector<1x16x128xf32>
    %16 = vector.shape_cast %15 : vector<1x16x128xf32> to vector<16x128xf32>
    %17 = vector.broadcast %14 : f32 to vector<16x128xf32>
    %18 = arith.mulf %17, %16 : vector<16x128xf32>
    %19 = arith.addf %13, %18 : vector<16x128xf32>
    %c3 = arith.constant 3 : index
    %20 = memref.load %arg1[%c3] : memref<9xf32, #tpu.memory_space<smem>>
    %c0_10 = arith.constant 0 : index
    %c1_11 = arith.constant 1 : index
    %c0_12 = arith.constant 0 : index
    %21 = vector.load %arg3[%c0_10, %c1_11, %c0_12] : memref<1x18x130xf32, #tpu.memory_space<vmem>>, vector<1x16x128xf32>
    %22 = vector.shape_cast %21 : vector<1x16x128xf32> to vector<16x128xf32>
    %23 = vector.broadcast %20 : f32 to vector<16x128xf32>
    %24 = arith.mulf %23, %22 : vector<16x128xf32>
    %25 = arith.addf %19, %24 : vector<16x128xf32>
    %c4 = arith.constant 4 : index
    %26 = memref.load %arg1[%c4] : memref<9xf32, #tpu.memory_space<smem>>
    %c0_13 = arith.constant 0 : index
    %c1_14 = arith.constant 1 : index
    %c1_15 = arith.constant 1 : index
    %27 = vector.load %arg3[%c0_13, %c1_14, %c1_15] : memref<1x18x130xf32, #tpu.memory_space<vmem>>, vector<1x16x128xf32>
    %28 = vector.shape_cast %27 : vector<1x16x128xf32> to vector<16x128xf32>
    %29 = vector.broadcast %26 : f32 to vector<16x128xf32>
    %30 = arith.mulf %29, %28 : vector<16x128xf32>
    %31 = arith.addf %25, %30 : vector<16x128xf32>
    %c5 = arith.constant 5 : index
    %32 = memref.load %arg1[%c5] : memref<9xf32, #tpu.memory_space<smem>>
    %c0_16 = arith.constant 0 : index
    %c1_17 = arith.constant 1 : index
    %c2_18 = arith.constant 2 : index
    %33 = vector.load %arg3[%c0_16, %c1_17, %c2_18] : memref<1x18x130xf32, #tpu.memory_space<vmem>>, vector<1x16x128xf32>
    %34 = vector.shape_cast %33 : vector<1x16x128xf32> to vector<16x128xf32>
    %35 = vector.broadcast %32 : f32 to vector<16x128xf32>
    %36 = arith.mulf %35, %34 : vector<16x128xf32>
    %37 = arith.addf %31, %36 : vector<16x128xf32>
    %c6 = arith.constant 6 : index
    %38 = memref.load %arg1[%c6] : memref<9xf32, #tpu.memory_space<smem>>
    %c0_19 = arith.constant 0 : index
    %c2_20 = arith.constant 2 : index
    %c0_21 = arith.constant 0 : index
    %39 = vector.load %arg3[%c0_19, %c2_20, %c0_21] : memref<1x18x130xf32, #tpu.memory_space<vmem>>, vector<1x16x128xf32>
    %40 = vector.shape_cast %39 : vector<1x16x128xf32> to vector<16x128xf32>
    %41 = vector.broadcast %38 : f32 to vector<16x128xf32>
    %42 = arith.mulf %41, %40 : vector<16x128xf32>
    %43 = arith.addf %37, %42 : vector<16x128xf32>
    %c7 = arith.constant 7 : index
    %44 = memref.load %arg1[%c7] : memref<9xf32, #tpu.memory_space<smem>>
    %c0_22 = arith.constant 0 : index
    %c2_23 = arith.constant 2 : index
    %c1_24 = arith.constant 1 : index
    %45 = vector.load %arg3[%c0_22, %c2_23, %c1_24] : memref<1x18x130xf32, #tpu.memory_space<vmem>>, vector<1x16x128xf32>
    %46 = vector.shape_cast %45 : vector<1x16x128xf32> to vector<16x128xf32>
    %47 = vector.broadcast %44 : f32 to vector<16x128xf32>
    %48 = arith.mulf %47, %46 : vector<16x128xf32>
    %49 = arith.addf %43, %48 : vector<16x128xf32>
    %c8 = arith.constant 8 : index
    %50 = memref.load %arg1[%c8] : memref<9xf32, #tpu.memory_space<smem>>
    %c0_25 = arith.constant 0 : index
    %c2_26 = arith.constant 2 : index
    %c2_27 = arith.constant 2 : index
    %51 = vector.load %arg3[%c0_25, %c2_26, %c2_27] : memref<1x18x130xf32, #tpu.memory_space<vmem>>, vector<1x16x128xf32>
    %52 = vector.shape_cast %51 : vector<1x16x128xf32> to vector<16x128xf32>
    %53 = vector.broadcast %50 : f32 to vector<16x128xf32>
    %54 = arith.mulf %53, %52 : vector<16x128xf32>
    %55 = arith.addf %49, %54 : vector<16x128xf32>
    %c0_28 = arith.constant 0 : index
    %c0_29 = arith.constant 0 : index
    %56 = vector.load %arg4[%c0_28, %c0_29] : memref<16x128xf32, #tpu.memory_space<vmem>>, vector<16x128xf32>
    tpu.vector_store %arg4[%c0_28, %c0_29], %55 {strides = array<i32>} : memref<16x128xf32, #tpu.memory_space<vmem>>, vector<16x128xf32>,
    return
  }
  func.func @transform_0(%arg0: i32) -> i32 {
    %c0_i32 = arith.constant 0 : i32
    %c0_i32_0 = arith.constant 0 : i32
    return %c0_i32 : i32
  }
  func.func @transform_1(%arg0: i32) -> i32 {
    %c0_i32 = arith.constant 0 : i32
    %c0_i32_0 = arith.constant 0 : i32
    return %c0_i32 : i32
  }
  func.func @transform_2(%arg0: i32) -> (i32, i32, i32) {
    %c0_i32 = arith.constant 0 : i32
    %c0_i32_0 = arith.constant 0 : i32
    %c0_i32_1 = arith.constant 0 : i32
    return %arg0, %c0_i32, %c0_i32_0 : i32, i32, i32
  }
  func.func @transform_3(%arg0: i32) -> (i32, i32) {
    %c0_i32 = arith.constant 0 : i32
    %c0_i32_0 = arith.constant 0 : i32
    return %arg0, %c0_i32 : i32, i32
  }
}

</mosaic_0001>

<llo_original>
// kernel: tpu_custom_call.1
$region0: #{tpu_custom_call.1}
  #allocation0 [shape = 'u32[]', space=smem, size = 0x4, offset = 0x4, fixed_abs, tag = 'smem constant byte address 0x4 - core index']
  #allocation1 [shape = 'u32[144,128]{1,0:T(1,128)}', space=vmem, size = 0x12000, scoped, tag = 'internal scratch']
  #allocation2 [shape = 'f32[1]{0:T(128)S(6)}', space=smem, size = 0x200, scoped, tag = 'scoped memory for tpu_custom_call.1']
  %s0 = inlined_call_operand.vmem [shape: f32[9], index: 0, kind: input, shape index: {}]
  %s1 = inlined_call_operand.<no memory space> [shape: f32[1], index: 1, kind: input, shape index: {}]
  %s2 = inlined_call_operand.vmem [shape: f32[1,18,130], index: 2, kind: input, shape index: {}]
  %s3 = inlined_call_operand.hbm [shape: f32[16,128], index: 3, kind: output, shape index: {}]
  %s4 = sld [smem:[#allocation0]]
  $region26: #{tpu_custom_call.1} parent=0
    _
  %s6 = ssub.s32 1, %s4
  %s7 = scalar_select 0, %s6, %s4
  %8 = sst [smem:[#allocation2]] %s1
  $region1: #{tpu_custom_call.1} parent=0
    #allocation3 [shape = 'u8[512]{0}', space=smem, size = 0x200, scoped, tag = 'input window, operand 0, single buffered']
    #allocation4 [shape = 's32[1]{0}', space=sflag, size = 0x4, scoped, tag = 'scoped memory for tpu_custom_call.1']
    #allocation5 [shape = 's32[1]{0}', space=sflag, size = 0x4, scoped, tag = 'scoped memory for tpu_custom_call.1']
    #allocation6 [shape = 'u8[8192]{0}', space=vmem, size = 0x2000, scoped, tag = 'output window, operand 0, single buffered']
    %9 = vsyncpa [#allocation5], 0
    %10 = vsyncpa [#allocation4], 0
    // Predicated region
    $region2: #{tpu_custom_call.1} parent=1 // pred_check
      _
    $region3: #{tpu_custom_call.1} parent=1 // pred_check_branch
      %12 = sbr.rel (0) target = $region5
    $region4: #{tpu_custom_call.1} parent=1 // pred_region
      %s14 = ssub.s32 16, 16
      %15 = vsyncadd [#allocation5], %s14
      %s17 = sshll.u32 %s0, 4
      %s18 = int_to_ptr.vmem [resolvable:$true] %s17
      %20 = dma.vmem_to_smem %s18, 16, [#allocation3], [#allocation5]
    $region5: #{tpu_custom_call.1} parent=1 // pred_fallthru
      _
    // Predicated region
    $region6: #{tpu_custom_call.1} parent=1 // pred_check
      _
    $region7: #{tpu_custom_call.1} parent=1 // pred_check_branch
      %22 = sbr.rel (0) target = $region9
    $region8: #{tpu_custom_call.1} parent=1 // pred_region
      _
    $region9: #{tpu_custom_call.1} parent=1 // pred_fallthru
      _
    // Predicated region
    $region10: #{tpu_custom_call.1} parent=1 // pred_check
      _
    $region11: #{tpu_custom_call.1} parent=1 // pred_check_branch
      %24 = sbr.rel (0) target = $region13
    $region12: #{tpu_custom_call.1} parent=1 // pred_region
      _
    $region13: #{tpu_custom_call.1} parent=1 // pred_fallthru
      _
    // Predicated region
    $region14: #{tpu_custom_call.1} parent=1 // pred_check
      _
    $region15: #{tpu_custom_call.1} parent=1 // pred_check_branch
      %26 = sbr.rel (0) target = $region17
    $region16: #{tpu_custom_call.1} parent=1 // pred_region
      %27 = dma.done [#allocation5], 16
    $region17: #{tpu_custom_call.1} parent=1 // pred_fallthru
      _
    %28 = sfence
    %s29 = sld [smem:[#allocation2]]
    %v30 = vstv %s29
    %s31 = sld [smem:[#allocation3]]
    %v32 = vld [vmem:[%s2] sm:$0xff]
    %v33 = vld [vmem:[%s2 + $0x10] sm:$0xff]
    %v34 = vstv %s31
    %v35 = vmul.f32 %v34, %v32
    %v36 = vmul.f32 %v34, %v33
    %v37 = vadd.f32 %v30, %v35
    %v38 = vadd.f32 %v30, %v36
    %s39 = sld [smem:[#allocation3 + $0x1]]
    %v40 = vld [vmem:[%s2] sm:$0xff]
    %v41 = vld [vmem:[%s2 + $0x8] sm:$0xff]
    %v42 = vld [vmem:[%s2 + $0x10] sm:$0xff]
    %v43 = vld [vmem:[%s2 + $0x18] sm:$0xff]
    %v44 = vstv %s39
    %v45 = vmul.f32 %v44, %v40
    %v46 = vmul.f32 %v44, %v41
    %v47 = vmul.f32 %v44, %v42
    %v48 = vmul.f32 %v44, %v43
    %53 = vrot.lane.b32.xlu0 %v45, 127
    %v54 = vpop.permute.xlu0 %53
    %55 = vrot.lane.b32.xlu0 %v46, 127
    %v56 = vpop.permute.xlu0 %55
    %57 = vrot.lane.b32.xlu0 %v47, 127
    %v58 = vpop.permute.xlu0 %57
    %59 = vrot.lane.b32.xlu0 %v48, 127
    %v60 = vpop.permute.xlu0 %59
    %vm61 = vcmask 1039360
    %v62 = vsel %vm61, %v54, %v56
    %v63 = vsel %vm61, %v58, %v60
    %v66 = vadd.f32 %v37, %v62
    %v67 = vadd.f32 %v38, %v63
    %s68 = sld [smem:[#allocation3 + $0x2]]
    %v69 = vstv %s68
    %v70 = vmul.f32 %v69, %v40
    %v71 = vmul.f32 %v69, %v41
    %v72 = vmul.f32 %v69, %v42
    %v73 = vmul.f32 %v69, %v43
    %78 = vrot.lane.b32.xlu0 %v70, 126
    %v79 = vpop.permute.xlu0 %78
    %80 = vrot.lane.b32.xlu0 %v71, 126
    %v81 = vpop.permute.xlu0 %80
    %82 = vrot.lane.b32.xlu0 %v72, 126
    %v83 = vpop.permute.xlu0 %82
    %84 = vrot.lane.b32.xlu0 %v73, 126
    %v85 = vpop.permute.xlu0 %84
    %vm86 = vcmask 1031168
    %v87 = vsel %vm86, %v79, %v81
    %v88 = vsel %vm86, %v83, %v85
    %v91 = vadd.f32 %v66, %v87
    %v92 = vadd.f32 %v67, %v88
    %s93 = sld [smem:[#allocation3 + $0x3]]
    %v94 = vld [vmem:[%s2] sm:$0xfe]
    %v95 = vld [vmem:[%s2 + $0x10] sm:$0xff]
    %v96 = vld [vmem:[%s2 + $0x20] sm:$0x1]
    %v97 = vstv %s93
    %v98 = vmul.f32 %v97, %v94
    %v99 = vmul.f32 %v97, %v95
    %v100 = vmul.f32 %v97, %v96
    %vm104 = vcmask 1046528
    %v105 = vrot.slane %v98, 1
    %v106 = vrot.slane %v99, 1
    %v107 = vsel %vm104, %v105, %v106
    %v108 = vrot.slane %v100, 1
    %v109 = vsel %vm104, %v106, %v108
    %v112 = vadd.f32 %v91, %v107
    %v113 = vadd.f32 %v92, %v109
    %s114 = sld [smem:[#allocation3 + $0x4]]
    %v115 = vld [vmem:[%s2] sm:$0xfe]
    %v116 = vld [vmem:[%s2 + $0x8] sm:$0xfe]
    %v117 = vld [vmem:[%s2 + $0x10] sm:$0xff]
    %v118 = vld [vmem:[%s2 + $0x18] sm:$0xff]
    %v119 = vld [vmem:[%s2 + $0x20] sm:$0x1]
    %v120 = vld [vmem:[%s2 + $0x28] sm:$0x1]
    %v121 = vstv %s114
    %v122 = vmul.f32 %v121, %v115
    %v123 = vmul.f32 %v121, %v116
    %v124 = vmul.f32 %v121, %v117
    %v125 = vmul.f32 %v121, %v118
    %v126 = vmul.f32 %v121, %v119
    %v127 = vmul.f32 %v121, %v120
    %v134 = vrot.slane %v122, 1
    %v135 = vrot.slane %v124, 1
    %v136 = vsel %vm104, %v134, %v135
    %v137 = vrot.slane %v123, 1
    %v138 = vrot.slane %v125, 1
    %v139 = vsel %vm104, %v137, %v138
    %v140 = vrot.slane %v126, 1
    %v141 = vsel %vm104, %v135, %v140
    %v142 = vrot.slane %v127, 1
    %v143 = vsel %vm104, %v138, %v142
    %144 = vrot.lane.b32.xlu0 %v136, 127
    %v145 = vpop.permute.xlu0 %144
    %146 = vrot.lane.b32.xlu0 %v139, 127
    %v147 = vpop.permute.xlu0 %146
    %148 = vrot.lane.b32.xlu0 %v141, 127
    %v149 = vpop.permute.xlu0 %148
    %150 = vrot.lane.b32.xlu0 %v143, 127
    %v151 = vpop.permute.xlu0 %150
    %v152 = vsel %vm61, %v145, %v147
    %v153 = vsel %vm61, %v149, %v151
    %v156 = vadd.f32 %v112, %v152
    %v157 = vadd.f32 %v113, %v153
    %s158 = sld [smem:[#allocation3 + $0x5]]
    %v159 = vstv %s158
    %v160 = vmul.f32 %v159, %v115
    %v161 = vmul.f32 %v159, %v116
    %v162 = vmul.f32 %v159, %v117
    %v163 = vmul.f32 %v159, %v118
    %v164 = vmul.f32 %v159, %v119
    %v165 = vmul.f32 %v159, %v120
    %v172 = vrot.slane %v160, 1
    %v173 = vrot.slane %v162, 1
    %v174 = vsel %vm104, %v172, %v173
    %v175 = vrot.slane %v161, 1
    %v176 = vrot.slane %v163, 1
    %v177 = vsel %vm104, %v175, %v176
    %v178 = vrot.slane %v164, 1
    %v179 = vsel %vm104, %v173, %v178
    %v180 = vrot.slane %v165, 1
    %v181 = vsel %vm104, %v176, %v180
    %182 = vrot.lane.b32.xlu0 %v174, 126
    %v183 = vpop.permute.xlu0 %182
    %184 = vrot.lane.b32.xlu0 %v177, 126
    %v185 = vpop.permute.xlu0 %184
    %186 = vrot.lane.b32.xlu0 %v179, 126
    %v187 = vpop.permute.xlu0 %186
    %188 = vrot.lane.b32.xlu0 %v181, 126
    %v189 = vpop.permute.xlu0 %188
    %v190 = vsel %vm86, %v183, %v185
    %v191 = vsel %vm86, %v187, %v189
    %v194 = vadd.f32 %v156, %v190
    %v195 = vadd.f32 %v157, %v191
    %s196 = sld [smem:[#allocation3 + $0x6]]
    %v197 = vld [vmem:[%s2] sm:$0xfc]
    %v198 = vld [vmem:[%s2 + $0x20] sm:$0x3]
    %v199 = vstv %s196
    %v200 = vmul.f32 %v199, %v197
    %v201 = vmul.f32 %v199, %v95
    %v202 = vmul.f32 %v199, %v198
    %vm206 = vcmask 1045504
    %v207 = vrot.slane %v200, 2
    %v208 = vrot.slane %v201, 2
    %v209 = vsel %vm206, %v207, %v208
    %v210 = vrot.slane %v202, 2
    %v211 = vsel %vm206, %v208, %v210
    %v214 = vadd.f32 %v194, %v209
    %v215 = vadd.f32 %v195, %v211
    %s216 = sld [smem:[#allocation3 + $0x7]]
    %v217 = vld [vmem:[%s2] sm:$0xfc]
    %v218 = vld [vmem:[%s2 + $0x8] sm:$0xfc]
    %v219 = vld [vmem:[%s2 + $0x20] sm:$0x3]
    %v220 = vld [vmem:[%s2 + $0x28] sm:$0x3]
    %v221 = vstv %s216
    %v222 = vmul.f32 %v221, %v217
    %v223 = vmul.f32 %v221, %v218
    %v224 = vmul.f32 %v221, %v117
    %v225 = vmul.f32 %v221, %v118
    %v226 = vmul.f32 %v221, %v219
    %v227 = vmul.f32 %v221, %v220
    %v234 = vrot.slane %v222, 2
    %v235 = vrot.slane %v224, 2
    %v236 = vsel %vm206, %v234, %v235
    %v237 = vrot.slane %v223, 2
    %v238 = vrot.slane %v225, 2
    %v239 = vsel %vm206, %v237, %v238
    %v240 = vrot.slane %v226, 2
    %v241 = vsel %vm206, %v235, %v240
    %v242 = vrot.slane %v227, 2
    %v243 = vsel %vm206, %v238, %v242
    %244 = vrot.lane.b32.xlu0 %v236, 127
    %v245 = vpop.permute.xlu0 %244
    %246 = vrot.lane.b32.xlu0 %v239, 127
    %v247 = vpop.permute.xlu0 %246
    %248 = vrot.lane.b32.xlu0 %v241, 127
    %v249 = vpop.permute.xlu0 %248
    %250 = vrot.lane.b32.xlu0 %v243, 127
    %v251 = vpop.permute.xlu0 %250
    %v252 = vsel %vm61, %v245, %v247
    %v253 = vsel %vm61, %v249, %v251
    %v256 = vadd.f32 %v214, %v252
    %v257 = vadd.f32 %v215, %v253
    %s258 = sld [smem:[#allocation3 + $0x8]]
    %v259 = vstv %s258
    %v260 = vmul.f32 %v259, %v217
    %v261 = vmul.f32 %v259, %v218
    %v262 = vmul.f32 %v259, %v117
    %v263 = vmul.f32 %v259, %v118
    %v264 = vmul.f32 %v259, %v219
    %v265 = vmul.f32 %v259, %v220
    %v272 = vrot.slane %v260, 2
    %v273 = vrot.slane %v262, 2
    %v274 = vsel %vm206, %v272, %v273
    %v275 = vrot.slane %v261, 2
    %v276 = vrot.slane %v263, 2
    %v277 = vsel %vm206, %v275, %v276
    %v278 = vrot.slane %v264, 2
    %v279 = vsel %vm206, %v273, %v278
    %v280 = vrot.slane %v265, 2
    %v281 = vsel %vm206, %v276, %v280
    %282 = vrot.lane.b32.xlu0 %v274, 126
    %v283 = vpop.permute.xlu0 %282
    %284 = vrot.lane.b32.xlu0 %v277, 126
    %v285 = vpop.permute.xlu0 %284
    %286 = vrot.lane.b32.xlu0 %v279, 126
    %v287 = vpop.permute.xlu0 %286
    %288 = vrot.lane.b32.xlu0 %v281, 126
    %v289 = vpop.permute.xlu0 %288
    %v290 = vsel %vm86, %v283, %v285
    %v291 = vsel %vm86, %v287, %v289
    %v294 = vadd.f32 %v256, %v290
    %v295 = vadd.f32 %v257, %v291
    %296 = vst [vmem:[#allocation6] sm:$0xff] %v294
    %297 = vst [vmem:[#allocation6 + $0x8] sm:$0xff] %v295
    // Predicated region
    $region18: #{tpu_custom_call.1} parent=1 // pred_check
      _
    $region19: #{tpu_custom_call.1} parent=1 // pred_check_branch
      %299 = sbr.rel (0) target = $region21
    $region20: #{tpu_custom_call.1} parent=1 // pred_region
      %s301 = ssub.s32 256, 256
      %302 = vsyncadd [#allocation4], %s301
      %s303 = sshll.u32 [#allocation6], 4
      %s304 = int_to_ptr.vmem [resolvable:$true] %s303
      %309 = dma.vmem_to_hbm [thread:$0]  %s304, 256, %s3, [#allocation4], 128, 128, 8
    $region21: #{tpu_custom_call.1} parent=1 // pred_fallthru
      _
    // Predicated region
    $region22: #{tpu_custom_call.1} parent=1 // pred_check
      _
    $region23: #{tpu_custom_call.1} parent=1 // pred_check_branch
      %311 = sbr.rel (0) target = $region25
    $region24: #{tpu_custom_call.1} parent=1 // pred_region
      %312 = dma.done [#allocation4], 256
    $region25: #{tpu_custom_call.1} parent=1 // pred_fallthru
      _
    %313 = vsyncpa [#allocation4], 1
    %314 = vsyncpa [#allocation5], 1

</llo_original>
